<compile_context>
chip_gen: v7x
topology: tpu7x:2x2x1
jax: 0.10.0
libtpu: 0.0.40
codegen_flags: <defaults>
</compile_context>

<pallas_src>
import functools

import jax
import jax.numpy as jnp
from jax import lax
from jax.experimental import pallas as pl
from jax.experimental.pallas import tpu as pltpu


def _self_attention_kernel(x_ref, wqkv_ref, bqkv_ref, o_ref, kv_ref, *,
                           d_model, tq, proj_chunk):
    """Blocks: x (1,S,D), w (3,D,D), b (3,1,D), out (1,TQ,D), scratch (2,S,D)."""
    D = d_model
    S = kv_ref.shape[1]
    qi = pl.program_id(1)

    # --- K/V projection for the full sequence, once per batch element -------
    # Computed at the first query tile and kept resident in VMEM scratch for
    # the remaining (sequential) query tiles of this batch element.  Chunked
    # so the f32 accumulation intermediate never exceeds (proj_chunk, D).
    @pl.when(qi == 0)
    def _():
        w_k = wqkv_ref[1]                                   # (D, D) compute dtype
        w_v = wqkv_ref[2]
        b_k = bqkv_ref[1].astype(jnp.float32)               # (1, D) f32
        b_v = bqkv_ref[2].astype(jnp.float32)

        def proj_body(c, carry):
            r0 = pl.multiple_of(c * proj_chunk, proj_chunk)
            xc = x_ref[0, pl.ds(r0, proj_chunk), :]         # (chunk, D)
            kc = jnp.dot(xc, w_k, preferred_element_type=jnp.float32) + b_k
            vc = jnp.dot(xc, w_v, preferred_element_type=jnp.float32) + b_v
            kv_ref[0, pl.ds(r0, proj_chunk), :] = kc.astype(kv_ref.dtype)
            kv_ref[1, pl.ds(r0, proj_chunk), :] = vc.astype(kv_ref.dtype)
            return carry

        lax.fori_loop(0, S // proj_chunk, proj_body, 0)

    # --- Per-tile Q projection ----------------------------------------------
    row0 = pl.multiple_of(qi * tq, tq)
    x_tile = x_ref[0, pl.ds(row0, tq), :]                   # (TQ, D) compute dtype
    q = jnp.dot(x_tile, wqkv_ref[0],
                preferred_element_type=jnp.float32)         # (TQ, D) f32 accum
    q = q + bqkv_ref[0].astype(jnp.float32)
    # Fold the 1/sqrt(D) scale into Q (D-wide) instead of the (TQ, S) scores.
    q = q * (1.0 / jnp.sqrt(jnp.float32(D)))

    k = kv_ref[0]                                           # (S, D) lane-dense
    v = kv_ref[1]                                           # (S, D) lane-dense

    # Scores (TQ, S): contract the feature axis of Q and K directly (no k.T).
    scores = lax.dot_general(q.astype(k.dtype), k, (((1,), (1,)), ((), ())),
                             preferred_element_type=jnp.float32)

    # Numerically stable softmax along the key axis; 1/denom folded into the
    # (TQ, D) context instead of the (TQ, S) probabilities.
    m = jnp.max(scores, axis=-1, keepdims=True)
    p = jnp.exp(scores - m)
    denom = jnp.sum(p, axis=-1, keepdims=True)

    ctx = jnp.dot(p.astype(v.dtype), v,
                  preferred_element_type=jnp.float32)       # (TQ, D) f32

    # EUP approximate reciprocal (free slot) + one Newton step on the VPU.
    inv = pl.reciprocal(denom, approx=True)
    inv = inv * (2.0 - denom * inv)
    o_ref[0] = (ctx * inv).astype(o_ref.dtype)


def _vmem_budget_bytes():
    """Generation-aware VMEM budget (75% of physical, 64 MiB fallback)."""
    cap = 64 * 1024 * 1024
    try:
        info = pltpu.get_tpu_info()
        cap = int(getattr(info, "vmem_capacity_bytes", cap))
    except Exception:
        pass
    return (cap * 3) // 4


def _largest_divisor_tile(S, cap):
    """Largest t <= cap with S % t == 0 and t % 8 == 0; falls back to S."""
    if S <= cap:
        return S
    for t in range(int(cap), 7, -1):
        if S % t == 0 and t % 8 == 0:
            return t
    # TODO(synk): pad S + mask instead of falling back to a full-length tile.
    return S


def _choose_query_tile(S, D, vmem_budget, kv_itemsize, out_itemsize):
    """Size TQ so scores/probs + resident buffers fit the VMEM budget."""
    # Resident: K/V scratch (2*S*D) + double-buffered x (2*S*D) + weights (x2).
    fixed = 4 * S * D * kv_itemsize + 8 * D * D * kv_itemsize
    # Per query row: f32 scores + probs (+ exp temp) ~ 12*S B, q/ctx f32
    # (8*D B), the compute-dtype x tile and double-buffered output rows.
    per_row = 12 * S + 8 * D + kv_itemsize * D + 2 * out_itemsize * D
    avail = max(vmem_budget - fixed, per_row * 8)
    cap = max(min(1024, avail // per_row), 8)
    return _largest_divisor_tile(S, cap)


def self_attention(x, w_q, w_k, w_v, b_q, b_k, b_v, *, tq=None,
                   compute_dtype=None):
    """x: (B, S, D); w_*: (D, D) in x@W orientation; b_*: (1, D) or (D,)."""
    B, S, D = x.shape
    out_dtype = x.dtype
    if compute_dtype is None:
        # bf16 MXU operands (f32 accumulation) by default for f32 inputs.
        compute_dtype = jnp.bfloat16 if x.dtype == jnp.float32 else x.dtype

    vmem_budget = _vmem_budget_bytes()
    kv_itemsize = jnp.dtype(compute_dtype).itemsize
    if tq is None:
        tq = _choose_query_tile(S, D, vmem_budget, kv_itemsize,
                                jnp.dtype(out_dtype).itemsize)
    assert S % tq == 0, "query tile must divide sequence length"
    proj_chunk = _largest_divisor_tile(S, 512)

    # Host-side: cast operands to the MXU compute dtype; stack the three
    # projections on a leading axis (lane-dense per-projection slabs; each
    # wqkv_ref[j] read in-kernel is a static leading-axis index, i.e. free).
    x_c = x.astype(compute_dtype)
    w_qkv = jnp.stack([w_q, w_k, w_v], axis=0).astype(compute_dtype)  # (3,D,D)
    b_qkv = jnp.stack([b_q.reshape(1, D), b_k.reshape(1, D),
                       b_v.reshape(1, D)], axis=0).astype(jnp.float32)  # (3,1,D)

    kernel = functools.partial(_self_attention_kernel, d_model=D, tq=tq,
                               proj_chunk=proj_chunk)

    return pl.pallas_call(
        kernel,
        out_shape=jax.ShapeDtypeStruct((B, S, D), out_dtype),
        grid_spec=pltpu.PrefetchScalarGridSpec(
            num_scalar_prefetch=0,
            grid=(B, S // tq),
            in_specs=[
                # Full-sequence x block; index constant over the query axis so
                # it stays resident across query tiles of one batch element.
                pl.BlockSpec((1, S, D), lambda b, qi: (b, 0, 0)),
                # Stacked weights / biases: constant index maps -> DMA'd once.
                pl.BlockSpec((3, D, D), lambda b, qi: (0, 0, 0)),
                pl.BlockSpec((3, 1, D), lambda b, qi: (0, 0, 0)),
            ],
            out_specs=pl.BlockSpec((1, tq, D), lambda b, qi: (b, qi, 0)),
            # K/V for the whole sequence (lane-dense per slab), persists across
            # the sequential query-tile axis.
            scratch_shapes=[pltpu.VMEM((2, S, D), compute_dtype)],
        ),
        compiler_params=pltpu.CompilerParams(
            # B is independent (megacore-shardable); the query-tile axis
            # carries the K/V scratch, so it MUST stay sequential.
            dimension_semantics=("parallel", "arbitrary"),
            vmem_limit_bytes=int(vmem_budget),
        ),
    )(x_c, w_qkv, b_qkv)


def self_attention_ref(x, w_q, w_k, w_v, b_q, b_k, b_v):
    """Plain-JAX reference mirroring the PyTorch forward."""
    D = x.shape[-1]
    q = x @ w_q + b_q
    k = x @ w_k + b_k
    v = x @ w_v + b_v
    scores = jnp.einsum("bqd,bkd->bqk", q, k) / jnp.sqrt(jnp.float32(D))
    w = jax.nn.softmax(scores, axis=-1)
    return jnp.einsum("bqk,bkd->bqd", w, v)


if __name__ == "__main__":
    B, S, D = 2, 8, 32  # batch, seq_len, d_model

    key = jax.random.PRNGKey(0)
    kx, kwq, kwk, kwv, kbq, kbk, kbv = jax.random.split(key, 7)

    x = jax.random.normal(kx, (B, S, D), dtype=jnp.float32)

    # Deterministic parameter init (nn.Linear-like uniform(-1/sqrt(D), 1/sqrt(D))).
    bound = 1.0 / jnp.sqrt(jnp.float32(D))
    w_q = jax.random.uniform(kwq, (D, D), jnp.float32, -bound, bound)
    w_k = jax.random.uniform(kwk, (D, D), jnp.float32, -bound, bound)
    w_v = jax.random.uniform(kwv, (D, D), jnp.float32, -bound, bound)
    b_q = jax.random.uniform(kbq, (1, D), jnp.float32, -bound, bound)
    b_k = jax.random.uniform(kbk, (1, D), jnp.float32, -bound, bound)
    b_v = jax.random.uniform(kbv, (1, D), jnp.float32, -bound, bound)

    ref = self_attention_ref(x, w_q, w_k, w_v, b_q, b_k, b_v)

    # Default path: bf16 MXU operands, f32 accumulation (perf configuration).
    out = jax.block_until_ready(self_attention(x, w_q, w_k, w_v, b_q, b_k, b_v))
    assert out.shape == (B, S, D)
    assert out.dtype == x.dtype
    assert jnp.allclose(out, ref, atol=3e-2, rtol=3e-2), "bf16 path mismatch"

    # Full-f32 path for a tight numerical check of the kernel structure.
    out_f32 = jax.block_until_ready(
        self_attention(x, w_q, w_k, w_v, b_q, b_k, b_v,
                       compute_dtype=jnp.float32))
    assert jnp.allclose(out_f32, ref, atol=1e-3, rtol=1e-3), "f32 path mismatch"

    print("KERNEL_OK")
</pallas_src>

<mosaic_0001>
module attributes {stable_mosaic.version = 11 : i64} {
  func.func @_self_attention_kernel(%arg0: i32, %arg1: i32, %arg2: memref<1x8x32xbf16, #tpu.memory_space<vmem>>, %arg3: memref<3x32x32xbf16, #tpu.memory_space<vmem>>, %arg4: memref<3x1x32xf32, #tpu.memory_space<vmem>>, %arg5: memref<1x8x32xf32, #tpu.memory_space<vmem>>, %arg6: memref<2x8x32xbf16, #tpu.memory_space<vmem>>) attributes {dimension_semantics = [#tpu.dimension_semantics<parallel>, #tpu.dimension_semantics<arbitrary>], iteration_bounds = array<i64: 2, 1>, scalar_prefetch = 0 : i64, scratch_operands = 1 : i64, tpu.core_type = #tpu.core_type<tc>, window_params = [{transform_indices = @transform_0, window_bounds = array<i64: 1, 8, 32>}, {pipeline_mode = #tpu.pipeline_mode<synchronous>, transform_indices = @transform_1, window_bounds = array<i64: 3, 32, 32>}, {pipeline_mode = #tpu.pipeline_mode<synchronous>, transform_indices = @transform_2, window_bounds = array<i64: 3, 1, 32>}, {transform_indices = @transform_3, window_bounds = array<i64: 1, 8, 32>}]} {
    %c0_i32 = arith.constant 0 : i32
    %0 = arith.cmpi eq, %arg1, %c0_i32 : i32
    %1 = arith.extui %0 : i1 to i32
    %c0_i32_0 = arith.constant 0 : i32
    %2 = arith.cmpi ne, %1, %c0_i32_0 : i32
    scf.if %2 {
      %c1_23 = arith.constant 1 : index
      %c0_24 = arith.constant 0 : index
      %c0_25 = arith.constant 0 : index
      %44 = vector.load %arg3[%c1_23, %c0_24, %c0_25] : memref<3x32x32xbf16, #tpu.memory_space<vmem>>, vector<1x32x32xbf16>
      %45 = vector.shape_cast %44 : vector<1x32x32xbf16> to vector<32x32xbf16>
      %c2 = arith.constant 2 : index
      %c0_26 = arith.constant 0 : index
      %c0_27 = arith.constant 0 : index
      %46 = vector.load %arg3[%c2, %c0_26, %c0_27] : memref<3x32x32xbf16, #tpu.memory_space<vmem>>, vector<1x32x32xbf16>
      %47 = vector.shape_cast %46 : vector<1x32x32xbf16> to vector<32x32xbf16>
      %c1_28 = arith.constant 1 : index
      %c0_29 = arith.constant 0 : index
      %c0_30 = arith.constant 0 : index
      %48 = vector.load %arg4[%c1_28, %c0_29, %c0_30] : memref<3x1x32xf32, #tpu.memory_space<vmem>>, vector<1x1x32xf32>
      %49 = vector.shape_cast %48 : vector<1x1x32xf32> to vector<1x32xf32>
      %c2_31 = arith.constant 2 : index
      %c0_32 = arith.constant 0 : index
      %c0_33 = arith.constant 0 : index
      %50 = vector.load %arg4[%c2_31, %c0_32, %c0_33] : memref<3x1x32xf32, #tpu.memory_space<vmem>>, vector<1x1x32xf32>
      %51 = vector.shape_cast %50 : vector<1x1x32xf32> to vector<1x32xf32>
      %c0_i32_34 = arith.constant 0 : i32
      %c8_i32_35 = arith.constant 8 : i32
      %52 = arith.muli %c0_i32_34, %c8_i32_35 : i32
      %53 = tpu.assume_multiple %52, 8 : i32
      %c0_36 = arith.constant 0 : index
      %54 = arith.index_cast %53 : i32 to index
      %c0_37 = arith.constant 0 : index
      %55 = vector.load %arg2[%c0_36, %54, %c0_37] : memref<1x8x32xbf16, #tpu.memory_space<vmem>>, vector<1x8x32xbf16>
      %56 = vector.shape_cast %55 : vector<1x8x32xbf16> to vector<8x32xbf16>
      %cst_38 = arith.constant dense<0.000000e+00> : vector<8x32xf32>
      %57 = tpu.matmul %56, %45, %cst_38 {dimension_numbers = #tpu.dot_dimension_numbers<[1], [0], [0], [1], [0, 0, 1, 1], [], []>} : vector<8x32xbf16>, vector<32x32xbf16>, vector<8x32xf32> -> vector<8x32xf32>
      %58 = vector.broadcast %49 : vector<1x32xf32> to vector<8x32xf32>
      %59 = arith.addf %57, %58 : vector<8x32xf32>
      %cst_39 = arith.constant dense<0.000000e+00> : vector<8x32xf32>
      %60 = tpu.matmul %56, %47, %cst_39 {dimension_numbers = #tpu.dot_dimension_numbers<[1], [0], [0], [1], [0, 0, 1, 1], [], []>} : vector<8x32xbf16>, vector<32x32xbf16>, vector<8x32xf32> -> vector<8x32xf32>
      %61 = vector.broadcast %51 : vector<1x32xf32> to vector<8x32xf32>
      %62 = arith.addf %60, %61 : vector<8x32xf32>
      %63 = arith.truncf %59 : vector<8x32xf32> to vector<8x32xbf16>
      %c0_40 = arith.constant 0 : index
      %64 = arith.index_cast %53 : i32 to index
      %c0_41 = arith.constant 0 : index
      %65 = vector.load %arg6[%c0_40, %64, %c0_41] : memref<2x8x32xbf16, #tpu.memory_space<vmem>>, vector<1x8x32xbf16>
      %66 = vector.shape_cast %65 : vector<1x8x32xbf16> to vector<8x32xbf16>
      %67 = vector.shape_cast %63 : vector<8x32xbf16> to vector<1x8x32xbf16>
      tpu.vector_store %arg6[%c0_40, %64, %c0_41], %67 {strides = array<i32>} : memref<2x8x32xbf16, #tpu.memory_space<vmem>>, vector<1x8x32xbf16>,
      %68 = arith.truncf %62 : vector<8x32xf32> to vector<8x32xbf16>
      %c1_42 = arith.constant 1 : index
      %69 = arith.index_cast %53 : i32 to index
      %c0_43 = arith.constant 0 : index
      %70 = vector.load %arg6[%c1_42, %69, %c0_43] : memref<2x8x32xbf16, #tpu.memory_space<vmem>>, vector<1x8x32xbf16>
      %71 = vector.shape_cast %70 : vector<1x8x32xbf16> to vector<8x32xbf16>
      %72 = vector.shape_cast %68 : vector<8x32xbf16> to vector<1x8x32xbf16>
      tpu.vector_store %arg6[%c1_42, %69, %c0_43], %72 {strides = array<i32>} : memref<2x8x32xbf16, #tpu.memory_space<vmem>>, vector<1x8x32xbf16>,
      %c1_i32 = arith.constant 1 : i32
    } else {
    }
    %c8_i32 = arith.constant 8 : i32
    %3 = arith.muli %arg1, %c8_i32 : i32
    %4 = tpu.assume_multiple %3, 8 : i32
    %c0 = arith.constant 0 : index
    %5 = arith.index_cast %4 : i32 to index
    %c0_1 = arith.constant 0 : index
    %6 = vector.load %arg2[%c0, %5, %c0_1] : memref<1x8x32xbf16, #tpu.memory_space<vmem>>, vector<1x8x32xbf16>
    %7 = vector.shape_cast %6 : vector<1x8x32xbf16> to vector<8x32xbf16>
    %c0_2 = arith.constant 0 : index
    %c0_3 = arith.constant 0 : index
    %c0_4 = arith.constant 0 : index
    %8 = vector.load %arg3[%c0_2, %c0_3, %c0_4] : memref<3x32x32xbf16, #tpu.memory_space<vmem>>, vector<1x32x32xbf16>
    %9 = vector.shape_cast %8 : vector<1x32x32xbf16> to vector<32x32xbf16>
    %cst = arith.constant dense<0.000000e+00> : vector<8x32xf32>
    %10 = tpu.matmul %7, %9, %cst {dimension_numbers = #tpu.dot_dimension_numbers<[1], [0], [0], [1], [0, 0, 1, 1], [], []>} : vector<8x32xbf16>, vector<32x32xbf16>, vector<8x32xf32> -> vector<8x32xf32>
    %c0_5 = arith.constant 0 : index
    %c0_6 = arith.constant 0 : index
    %c0_7 = arith.constant 0 : index
    %11 = vector.load %arg4[%c0_5, %c0_6, %c0_7] : memref<3x1x32xf32, #tpu.memory_space<vmem>>, vector<1x1x32xf32>
    %12 = vector.shape_cast %11 : vector<1x1x32xf32> to vector<1x32xf32>
    %13 = vector.broadcast %12 : vector<1x32xf32> to vector<8x32xf32>
    %14 = arith.addf %10, %13 : vector<8x32xf32>
    %cst_8 = arith.constant 3.200000e+01 : f32
    %15 = math.sqrt %cst_8 : f32
    %cst_9 = arith.constant 1.000000e+00 : f32
    %16 = arith.divf %cst_9, %15 : f32
    %17 = vector.broadcast %16 : f32 to vector<8x32xf32>
    %18 = arith.mulf %14, %17 : vector<8x32xf32>
    %c0_10 = arith.constant 0 : index
    %c0_11 = arith.constant 0 : index
    %c0_12 = arith.constant 0 : index
    %19 = vector.load %arg6[%c0_10, %c0_11, %c0_12] : memref<2x8x32xbf16, #tpu.memory_space<vmem>>, vector<1x8x32xbf16>
    %20 = vector.shape_cast %19 : vector<1x8x32xbf16> to vector<8x32xbf16>
    %c1 = arith.constant 1 : index
    %c0_13 = arith.constant 0 : index
    %c0_14 = arith.constant 0 : index
    %21 = vector.load %arg6[%c1, %c0_13, %c0_14] : memref<2x8x32xbf16, #tpu.memory_space<vmem>>, vector<1x8x32xbf16>
    %22 = vector.shape_cast %21 : vector<1x8x32xbf16> to vector<8x32xbf16>
    %23 = arith.truncf %18 : vector<8x32xf32> to vector<8x32xbf16>
    %cst_15 = arith.constant dense<0.000000e+00> : vector<8x8xf32>
    %24 = tpu.matmul %23, %20, %cst_15 {dimension_numbers = #tpu.dot_dimension_numbers<[1], [1], [0], [0], [0, 0, 1, 0], [], []>} : vector<8x32xbf16>, vector<8x32xbf16>, vector<8x8xf32> -> vector<8x8xf32>
    %cst_16 = arith.constant dense<0xFF800000> : vector<8xf32>
    %25 = vector.multi_reduction <maximumf>, %24, %cst_16 [1] : vector<8x8xf32> to vector<8xf32>
    %26 = vector.shape_cast %25 : vector<8xf32> to vector<8x1xf32>
    %27 = vector.broadcast %26 : vector<8x1xf32> to vector<8x8xf32>
    %28 = arith.subf %24, %27 : vector<8x8xf32>
    %29 = math.exp %28 : vector<8x8xf32>
    %cst_17 = arith.constant dense<0.000000e+00> : vector<8xf32>
    %30 = vector.multi_reduction <add>, %29, %cst_17 [1] : vector<8x8xf32> to vector<8xf32>
    %31 = vector.shape_cast %30 : vector<8xf32> to vector<8x1xf32>
    %32 = arith.truncf %29 : vector<8x8xf32> to vector<8x8xbf16>
    %cst_18 = arith.constant dense<0.000000e+00> : vector<8x32xf32>
    %33 = tpu.matmul %32, %22, %cst_18 {dimension_numbers = #tpu.dot_dimension_numbers<[1], [0], [0], [1], [0, 0, 1, 1], [], []>} : vector<8x8xbf16>, vector<8x32xbf16>, vector<8x32xf32> -> vector<8x32xf32>
    %34 = tpu.reciprocal %31 {approx = true} : vector<8x1xf32> -> vector<8x1xf32>
    %35 = arith.mulf %31, %34 : vector<8x1xf32>
    %cst_19 = arith.constant 2.000000e+00 : f32
    %36 = vector.broadcast %cst_19 : f32 to vector<8x1xf32>
    %37 = arith.subf %36, %35 : vector<8x1xf32>
    %38 = arith.mulf %34, %37 : vector<8x1xf32>
    %39 = vector.broadcast %38 : vector<8x1xf32> to vector<8x32xf32>
    %40 = arith.mulf %33, %39 : vector<8x32xf32>
    %c0_20 = arith.constant 0 : index
    %c0_21 = arith.constant 0 : index
    %c0_22 = arith.constant 0 : index
    %41 = vector.load %arg5[%c0_20, %c0_21, %c0_22] : memref<1x8x32xf32, #tpu.memory_space<vmem>>, vector<1x8x32xf32>
    %42 = vector.shape_cast %41 : vector<1x8x32xf32> to vector<8x32xf32>
    %43 = vector.shape_cast %40 : vector<8x32xf32> to vector<1x8x32xf32>
    tpu.vector_store %arg5[%c0_20, %c0_21, %c0_22], %43 {strides = array<i32>} : memref<1x8x32xf32, #tpu.memory_space<vmem>>, vector<1x8x32xf32>,
    return
  }
  func.func @transform_0(%arg0: i32, %arg1: i32) -> (i32, i32, i32) {
    %c0_i32 = arith.constant 0 : i32
    %c0_i32_0 = arith.constant 0 : i32
    %c0_i32_1 = arith.constant 0 : i32
    return %arg0, %c0_i32, %c0_i32_0 : i32, i32, i32
  }
  func.func @transform_1(%arg0: i32, %arg1: i32) -> (i32, i32, i32) {
    %c0_i32 = arith.constant 0 : i32
    %c0_i32_0 = arith.constant 0 : i32
    %c0_i32_1 = arith.constant 0 : i32
    %c0_i32_2 = arith.constant 0 : i32
    return %c0_i32, %c0_i32_0, %c0_i32_1 : i32, i32, i32
  }
  func.func @transform_2(%arg0: i32, %arg1: i32) -> (i32, i32, i32) {
    %c0_i32 = arith.constant 0 : i32
    %c0_i32_0 = arith.constant 0 : i32
    %c0_i32_1 = arith.constant 0 : i32
    %c0_i32_2 = arith.constant 0 : i32
    return %c0_i32, %c0_i32_0, %c0_i32_1 : i32, i32, i32
  }
  func.func @transform_3(%arg0: i32, %arg1: i32) -> (i32, i32, i32) {
    %c0_i32 = arith.constant 0 : i32
    %c0_i32_0 = arith.constant 0 : i32
    return %arg0, %arg1, %c0_i32 : i32, i32, i32
  }
}

</mosaic_0001>

<llo_original>
// kernel: tpu_custom_call.1
$region0: #{tpu_custom_call.1}
  #allocation0 [shape = 'u32[]', space=smem, size = 0x4, offset = 0x4, fixed_abs, tag = 'smem constant byte address 0x4 - core index']
  #allocation1 [shape = 'u32[144,128]{1,0:T(1,128)}', space=vmem, size = 0x12000, scoped, tag = 'internal scratch']
  #allocation2 [shape = 'bf16[2,8,32]{2,1,0:T(8,128)(2,1)}', space=vmem, size = 0x1000, scoped, tag = 'scratch operand']
  %s0 = inlined_call_operand.hbm [shape: bf16[2,8,32], index: 0, kind: input, shape index: {}]
  %s1 = inlined_call_operand.hbm [shape: bf16[3,32,32], index: 1, kind: input, shape index: {}]
  %s2 = inlined_call_operand.vmem [shape: f32[3,1,32], index: 2, kind: input, shape index: {}]
  %s3 = inlined_call_operand.hbm [shape: f32[2,8,32], index: 3, kind: output, shape index: {}]
  %s4 = sld [smem:[#allocation0]]
  $region57: #{tpu_custom_call.1} parent=0
    _
  %s6 = ssub.s32 1, %s4
  %s7 = scalar_select 0, %s6, %s4
  $region1: #{tpu_custom_call.1} parent=0
    #allocation3 [shape = 'u8[4096]{0}', space=vmem, size = 0x1000, scoped, tag = 'input window, operand 0']
    #allocation4 [shape = 's32[2]{0}', space=sflag, size = 0x8, scoped, tag = 'scoped memory for tpu_custom_call.1']
    #allocation5 [shape = 's32[2]{0}', space=sflag, size = 0x8, scoped, tag = 'scoped memory for tpu_custom_call.1']
    #allocation6 [shape = 'u8[24576]{0}', space=vmem, size = 0x6000, scoped, tag = 'input window, operand 1, single buffered']
    #allocation7 [shape = 's32[1]{0}', space=sflag, size = 0x4, scoped, tag = 'scoped memory for tpu_custom_call.1']
    #allocation8 [shape = 'u8[8192]{0}', space=vmem, size = 0x2000, scoped, tag = 'output window, operand 0']
    %8 = vsyncpa [#allocation4], 0
    %s9 = scalar_lea.sflag [#allocation4], 1
    %10 = vsyncpa %s9, 0
    %11 = vsyncpa [#allocation7], 0
    %12 = vsyncpa [#allocation5], 0
    %s13 = scalar_lea.sflag [#allocation5], 1
    %14 = vsyncpa %s13, 0
    loop: start=0, step=1, limit=4
    $region2: #{tpu_custom_call.1} parent=1 // loop_pre_header
      _
    $region3: #{tpu_custom_call.1} parent=1 // loop_header
      %s16 = sphi 0, %s20
      %p17 = scmp.ge.s32.totalorder %s16, 4
      %s23 = sphi 0, %s35
      %s24 = sphi 0, %s31
      %s25 = sphi 0, %s23
      %s26 = sphi 0, %s24
      %s27 = sphi 0, %s25
      %s28 = sphi 0, %s26
      %s38 = sphi 0, %s40
      %s41 = sphi 0, %s38
      %s42 = sphi 0, %s41
      %s58 = sphi 0, %s42
      %s62 = sphi 0, %s62
      %s64 = sphi 0, %s62
      %s65 = sphi 0, %s64
      %s79 = sphi 0, %s65
      %s83 = sphi 0, %s83
      %s85 = sphi 0, %s83
      %s86 = sphi 0, %s85
      %s100 = sphi 0, %s86
      %s108 = sphi 0, %s110
      %s111 = sphi 0, %s108
      %s112 = sphi 0, %s111
      %s128 = sphi 0, %s112
    $region4: #{tpu_custom_call.1} parent=1 // loop_header_branch
      %19 = sbr.rel (%p17) target = $region8
    $region5: #{tpu_custom_call.1} parent=1 // loop_body
      %s21 = ssub.s32 %s16, 1
      %s22 = ssub.s32 %s16, 2
      %s29 = sadd.s32 1, %s24
      %p30 = scmp.ge.s32.totalorder %s29, 1
      %s31 = scalar_select %p30, 0, %s29
      %s32 = sadd.s32 1, %s23
      %s33 = scalar_select %p30, %s32, %s23
      %p34 = scmp.ge.s32.totalorder %s33, 2
      %s35 = scalar_select %p34, 0, %s33
      %s36 = ssub.s32 %s23, %s35
      %p37 = scmp.eq.s32.totalorder %s36, 0
      %s39 = sadd.s32 %s38, 1
      %s40 = scalar_select %p37, %s38, %s39
      %p43 = pneg %p37
      %p44 = scmp.eq.s32.totalorder %s16, 1
      %p45 = por %p43, %p44
      %p46 = scmp.ne.s32.totalorder %s38, %s41
      %p47 = scmp.eq.s32.totalorder %s16, 0
      %p48 = por %p46, %p47
      %p49 = scmp.ne.s32.totalorder %s38, %s41
      %p50 = scmp.eq.s32.totalorder %s21, 1
      %p51 = por %p49, %p50
      %p52 = scmp.ne.s32.totalorder %s41, %s42
      %p53 = scmp.eq.s32.totalorder %s21, 0
      %p54 = por %p52, %p53
      %p55 = scmp.ne.s32.totalorder %s41, %s42
      %p56 = scmp.eq.s32.totalorder %s22, 1
      %p57 = por %p55, %p56
      %p59 = scmp.ne.s32.totalorder %s42, %s58
      %p60 = scmp.eq.s32.totalorder %s22, 0
      %p61 = por %p59, %p60
      %s63 = sadd.s32 %s62, 1
      %p66 = scmp.eq.s32.totalorder %s16, 1
      %p67 = scmp.ne.s32.totalorder %s62, %s64
      %p68 = scmp.eq.s32.totalorder %s16, 0
      %p69 = por %p67, %p68
      %p70 = scmp.ne.s32.totalorder %s62, %s64
      %p71 = scmp.eq.s32.totalorder %s21, 1
      %p72 = por %p70, %p71
      %p73 = scmp.ne.s32.totalorder %s64, %s65
      %p74 = scmp.eq.s32.totalorder %s21, 0
      %p75 = por %p73, %p74
      %p76 = scmp.ne.s32.totalorder %s64, %s65
      %p77 = scmp.eq.s32.totalorder %s22, 1
      %p78 = por %p76, %p77
      %p80 = scmp.ne.s32.totalorder %s65, %s79
      %p81 = scmp.eq.s32.totalorder %s22, 0
      %p82 = por %p80, %p81
      %s84 = sadd.s32 %s83, 1
      %p87 = scmp.eq.s32.totalorder %s16, 1
      %p88 = scmp.ne.s32.totalorder %s83, %s85
      %p89 = scmp.eq.s32.totalorder %s16, 0
      %p90 = por %p88, %p89
      %p91 = scmp.ne.s32.totalorder %s83, %s85
      %p92 = scmp.eq.s32.totalorder %s21, 1
      %p93 = por %p91, %p92
      %p94 = scmp.ne.s32.totalorder %s85, %s86
      %p95 = scmp.eq.s32.totalorder %s21, 0
      %p96 = por %p94, %p95
      %p97 = scmp.ne.s32.totalorder %s85, %s86
      %p98 = scmp.eq.s32.totalorder %s22, 1
      %p99 = por %p97, %p98
      %p101 = scmp.ne.s32.totalorder %s86, %s100
      %p102 = scmp.eq.s32.totalorder %s22, 0
      %p103 = por %p101, %p102
      %s104 = ssub.s32 %s23, %s35
      %s105 = ssub.s32 %s24, %s31
      %s106 = sor.u32 %s104, %s105
      %p107 = scmp.eq.s32.totalorder %s106, 0
      %s109 = sadd.s32 %s108, 1
      %s110 = scalar_select %p107, %s108, %s109
      %p113 = pneg %p107
      %p114 = scmp.eq.s32.totalorder %s16, 1
      %p115 = por %p113, %p114
      %p116 = scmp.ne.s32.totalorder %s108, %s111
      %p117 = scmp.eq.s32.totalorder %s16, 0
      %p118 = por %p116, %p117
      %p119 = scmp.ne.s32.totalorder %s108, %s111
      %p120 = scmp.eq.s32.totalorder %s21, 1
      %p121 = por %p119, %p120
      %p122 = scmp.ne.s32.totalorder %s111, %s112
      %p123 = scmp.eq.s32.totalorder %s21, 0
      %p124 = por %p122, %p123
      %p125 = scmp.ne.s32.totalorder %s111, %s112
      %p126 = scmp.eq.s32.totalorder %s22, 1
      %p127 = por %p125, %p126
      %p129 = scmp.ne.s32.totalorder %s112, %s128
      %p130 = scmp.eq.s32.totalorder %s22, 0
      %p131 = por %p129, %p130
      %p132 = scmp.le.s32.totalorder 1, %s16
      %p133 = scmp.lt.s32.totalorder %s16, 3
      %p134 = pnand %p132, %p133
      %p135 = pneg %p134
      // Predicated region
      $region9: #{tpu_custom_call.1} parent=5 // pred_check
        _
      $region10: #{tpu_custom_call.1} parent=5 // pred_check_branch
        %137 = sbr.rel (%p134) target = $region12
      $region11: #{tpu_custom_call.1} parent=5 // pred_region
        %s138 = ssub.s32 %s16, 1
        // Predicated region
        $region13: #{tpu_custom_call.1} parent=11 // pred_check
          %p139 = pneg %p75
        $region14: #{tpu_custom_call.1} parent=11 // pred_check_branch
          %141 = sbr.rel (%p139) target = $region16
        $region15: #{tpu_custom_call.1} parent=11 // pred_region
          %s143 = ssub.s32 768, 768
          %144 = vsyncadd [#allocation7], %s143
          %s145 = sshll.u32 [#allocation6], 4
          %s146 = int_to_ptr.vmem [resolvable:$true] %s145
          %151 = dma.hbm_to_vmem [thread:$0]  %s1, 768, %s146, [#allocation7], 64, 64, 4
        $region16: #{tpu_custom_call.1} parent=11 // pred_fallthru
          _
        // Predicated region
        $region17: #{tpu_custom_call.1} parent=11 // pred_check
          %p152 = pneg %p96
        $region18: #{tpu_custom_call.1} parent=11 // pred_check_branch
          %154 = sbr.rel (%p152) target = $region20
        $region19: #{tpu_custom_call.1} parent=11 // pred_region
          _
        $region20: #{tpu_custom_call.1} parent=11 // pred_fallthru
          _
      $region12: #{tpu_custom_call.1} parent=5 // pred_fallthru
        _
      %p155 = scmp.lt.s32.totalorder %s16, 2
      // Predicated region
      $region21: #{tpu_custom_call.1} parent=5 // pred_check
        %p156 = pneg %p155
      $region22: #{tpu_custom_call.1} parent=5 // pred_check_branch
        %158 = sbr.rel (%p156) target = $region24
      $region23: #{tpu_custom_call.1} parent=5 // pred_region
        // Predicated region
        $region25: #{tpu_custom_call.1} parent=23 // pred_check
          %p159 = pneg %p48
        $region26: #{tpu_custom_call.1} parent=23 // pred_check_branch
          %161 = sbr.rel (%p159) target = $region28
        $region27: #{tpu_custom_call.1} parent=23 // pred_region
          %s162 = sand.u32 %s38, 1
          %s163 = scalar_lea.sflag [#allocation4], %s162
          %s164 = sand.u32 %s38, 1
          %s165 = smul.addr %s164, 4
          %s166 = scalar_lea.vmem [#allocation3], %s165
          %s168 = ssub.s32 64, 64
          %169 = vsyncadd %s163, %s168
          %s170 = smul.addr %s23, 64
          %s171 = scalar_lea.hbm %s0, %s170
          %s173 = sshll.u32 %s166, 4
          %s174 = int_to_ptr.vmem [resolvable:$true] %s173
          %176 = dma.hbm_to_vmem [thread:$0]  %s171, 64, %s174, %s163
        $region28: #{tpu_custom_call.1} parent=23 // pred_fallthru
          _
      $region24: #{tpu_custom_call.1} parent=5 // pred_fallthru
        _
      %p177 = scmp.le.s32.totalorder 1, %s16
      %p178 = scmp.lt.s32.totalorder %s16, 3
      %p179 = pnand %p177, %p178
      %p180 = pneg %p179
      // Predicated region
      $region29: #{tpu_custom_call.1} parent=5 // pred_check
        _
      $region30: #{tpu_custom_call.1} parent=5 // pred_check_branch
        %182 = sbr.rel (%p179) target = $region32
      $region31: #{tpu_custom_call.1} parent=5 // pred_region
        %s183 = ssub.s32 %s16, 1
        %s184 = sand.u32 %s41, 1
        %s185 = scalar_lea.sflag [#allocation4], %s184
        %s186 = sand.u32 %s41, 1
        %s187 = smul.addr %s186, 4
        %s188 = scalar_lea.vmem [#allocation3], %s187
        // Predicated region
        $region33: #{tpu_custom_call.1} parent=31 // pred_check
          %p189 = pneg %p54
        $region34: #{tpu_custom_call.1} parent=31 // pred_check_branch
          %191 = sbr.rel (%p189) target = $region36
        $region35: #{tpu_custom_call.1} parent=31 // pred_region
          %192 = dma.done %s185, 64
        $region36: #{tpu_custom_call.1} parent=31 // pred_fallthru
          _
        // Predicated region
        $region37: #{tpu_custom_call.1} parent=31 // pred_check
          %p193 = pneg %p75
        $region38: #{tpu_custom_call.1} parent=31 // pred_check_branch
          %195 = sbr.rel (%p193) target = $region40
        $region39: #{tpu_custom_call.1} parent=31 // pred_region
          %196 = dma.done [#allocation7], 768
        $region40: #{tpu_custom_call.1} parent=31 // pred_fallthru
          _
        %s197 = sand.u32 %s41, 1
        %s198 = scalar_lea.sflag [#allocation4], %s197
        %s199 = sand.u32 %s41, 1
        %s200 = smul.addr %s199, 4
        %s201 = scalar_lea.vmem [#allocation3], %s200
        %p202 = pneg %p54
        %p203 = pneg %p51
        %p204 = pneg %p75
        %p205 = pneg %p72
        %p206 = pneg %p96
        %p207 = pneg %p93
        %p208 = pneg %p124
        %p209 = pneg %p121
        %s210 = sand.u32 %s111, 1
        %s211 = scalar_lea.sflag [#allocation5], %s210
        %s212 = sand.u32 %s111, 1
        %s213 = smul.addr %s212, 8
        %s214 = scalar_lea.vmem [#allocation8], %s213
        %p216 = scmp.eq.s32.totalorder %s26, 0
        // Predicated region
        $region41: #{tpu_custom_call.1} parent=31 // pred_check
          %p217 = pneg %p216
        $region42: #{tpu_custom_call.1} parent=31 // pred_check_branch
          %219 = sbr.rel (%p217) target = $region44
        $region43: #{tpu_custom_call.1} parent=31 // pred_region
          %s220 = scalar_lea.vmem [#allocation6], 16
          %v221 = vld [vmem:[%s220] sm:$0xf]
          %v222 = vld [vmem:[%s220 + $0x4] sm:$0xf]
          %v223 = vld [vmem:[%s220 + $0x8] sm:$0xf]
          %v224 = vld [vmem:[%s220 + $0xc] sm:$0xf]
          %s225 = scalar_lea.vmem [#allocation6], 32
          %v226 = vld [vmem:[%s225] sm:$0xf]
          %v227 = vld [vmem:[%s225 + $0x4] sm:$0xf]
          %v228 = vld [vmem:[%s225 + $0x8] sm:$0xf]
          %v229 = vld [vmem:[%s225 + $0xc] sm:$0xf]
          %s230 = scalar_lea.vmem %s2, 1
          %v231 = vld [vmem:[%s230] sm:$0x1]
          %s232 = scalar_lea.vmem %s2, 2
          %v233 = vld [vmem:[%s232] sm:$0x1]
          %v234 = vld [vmem:[%s188] sm:$0xf]
          %v236 = vlaneseq
          %v237 = vshrl.u32 %v236, 7
          %v238 = vsub.s32 0, %v237
          %v239 = vrot.slane %v231, %v238
          %v245 = vunpack.c.l.b16 %v221
          %v246 = vunpack.c.l.b16 %v222
          %v247 = vunpack.c.l.b16 %v223
          %v248 = vunpack.c.l.b16 %v224
          %v249 = vpack.c.b16 %v246, %v245
          %v250 = vpack.c.b16 %v248, %v247
          %vm253 = vcmask 261120
          %v255 = vsel %vm253, %v234, 0
          %257 = vmatprep.subr.bf16.mxu0 0
          %258 = vmatpush1.bf16.msra.mxu0 %v249
          %259 = vmatprep.subr.bf16.mxu0 0
          %260 = vmatpush1.bf16.msra.mxu0 %v250
          %261 = vmatprep.subr.bf16.mxu0 0
          %262 = vmatpush1.bf16.msra.mxu0 0
          %263 = vmatprep.subr.bf16.mxu0 0
          %264 = vmatpush1.bf16.msra.mxu0 0
          %265 = vmatprep.subr.bf16.mxu0 0
          %266 = vmatpush1.bf16.msra.mxu0 0
          %267 = vmatprep.subr.bf16.mxu0 0
          %268 = vmatpush1.bf16.msra.mxu0 0
          %269 = vmatprep.subr.bf16.mxu0 0
          %270 = vmatpush1.bf16.msra.mxu0 0
          %271 = vmatprep.subr.bf16.mxu0 0
          %272 = vmatpush1.bf16.msra.mxu0 0
          %273 = vmatprep.subr.bf16.mxu0 0
          %274 = vmatpush1.bf16.msra.mxu0 0
          %275 = vmatprep.subr.bf16.mxu0 0
          %276 = vmatpush1.bf16.msra.mxu0 0
          %277 = vmatprep.subr.bf16.mxu0 0
          %278 = vmatpush1.bf16.msra.mxu0 0
          %279 = vmatprep.subr.bf16.mxu0 0
          %280 = vmatpush1.bf16.msra.mxu0 0
          %281 = vmatprep.subr.bf16.mxu0 0
          %282 = vmatpush1.bf16.msra.mxu0 0
          %283 = vmatprep.subr.bf16.mxu0 0
          %284 = vmatpush1.bf16.msra.mxu0 0
          %285 = vmatprep.subr.bf16.mxu0 0
          %286 = vmatpush1.bf16.msra.mxu0 0
          %287 = vmatprep.subr.bf16.mxu0 0
          %288 = vmatpush1.bf16.msra.mxu0 0
          %289 = vmatprep.mubr.bf16.mxu0 0
          %290 = vmatmul.mubr.bf16.gmra.mrb[0].mxu0 %v255
          %v291 = vpop.f32.mrb[0].mxu0
          %v292 = vadd.f32 %v239, %v291
          %v293 = vpop.f32.mrb[0].mxu0
          %v294 = vpop.f32.mrb[0].mxu0
          %v295 = vpop.f32.mrb[0].mxu0
          %296 = vdwg.mxu0
          %v298 = vlaneseq
          %v299 = vshrl.u32 %v298, 7
          %v300 = vsub.s32 0, %v299
          %v301 = vrot.slane %v233, %v300
          %v307 = vunpack.c.l.b16 %v226
          %v308 = vunpack.c.l.b16 %v227
          %v309 = vunpack.c.l.b16 %v228
          %v310 = vunpack.c.l.b16 %v229
          %v311 = vpack.c.b16 %v308, %v307
          %v312 = vpack.c.b16 %v310, %v309
          %315 = vmatprep.subr.bf16.mxu0 0
          %316 = vmatpush1.bf16.msra.mxu0 %v311
          %317 = vmatprep.subr.bf16.mxu0 0
          %318 = vmatpush1.bf16.msra.mxu0 %v312
          %319 = vmatprep.subr.bf16.mxu0 0
          %320 = vmatpush1.bf16.msra.mxu0 0
          %321 = vmatprep.subr.bf16.mxu0 0
          %322 = vmatpush1.bf16.msra.mxu0 0
          %323 = vmatprep.subr.bf16.mxu0 0
          %324 = vmatpush1.bf16.msra.mxu0 0
          %325 = vmatprep.subr.bf16.mxu0 0
          %326 = vmatpush1.bf16.msra.mxu0 0
          %327 = vmatprep.subr.bf16.mxu0 0
          %328 = vmatpush1.bf16.msra.mxu0 0
          %329 = vmatprep.subr.bf16.mxu0 0
          %330 = vmatpush1.bf16.msra.mxu0 0
          %331 = vmatprep.subr.bf16.mxu0 0
          %332 = vmatpush1.bf16.msra.mxu0 0
          %333 = vmatprep.subr.bf16.mxu0 0
          %334 = vmatpush1.bf16.msra.mxu0 0
          %335 = vmatprep.subr.bf16.mxu0 0
          %336 = vmatpush1.bf16.msra.mxu0 0
          %337 = vmatprep.subr.bf16.mxu0 0
          %338 = vmatpush1.bf16.msra.mxu0 0
          %339 = vmatprep.subr.bf16.mxu0 0
          %340 = vmatpush1.bf16.msra.mxu0 0
          %341 = vmatprep.subr.bf16.mxu0 0
          %342 = vmatpush1.bf16.msra.mxu0 0
          %343 = vmatprep.subr.bf16.mxu0 0
          %344 = vmatpush1.bf16.msra.mxu0 0
          %345 = vmatprep.subr.bf16.mxu0 0
          %346 = vmatpush1.bf16.msra.mxu0 0
          %347 = vmatprep.mubr.bf16.mxu0 0
          %348 = vmatmul.mubr.bf16.gmra.mrb[0].mxu0 %v255
          %v349 = vpop.f32.mrb[0].mxu0
          %v350 = vadd.f32 %v301, %v349
          %v351 = vpop.f32.mrb[0].mxu0
          %v352 = vpop.f32.mrb[0].mxu0
          %v353 = vpop.f32.mrb[0].mxu0
          %354 = vdwg.mxu0
          %v355 = vpack.c.bf16 %v292, %v292
          %vm356 = vcmask 257024
          %357 = vst.msk [vmem:[#allocation2] sm:$0xf] %vm356, %v355
          %v358 = vpack.c.bf16 %v350, %v350
          %s359 = sadd.s32 0, 1
          %s360 = smul.addr %s359, 4
          %s361 = scalar_lea.vmem [#allocation2], %s360
          %362 = vst.msk [vmem:[%s361] sm:$0xf] %vm356, %v358
        $region44: #{tpu_custom_call.1} parent=31 // pred_fallthru
          _
        %s363 = smul.u32 %s26, 8
        %s364 = sshra.s32 %s363, 3
        %s365 = sand.u32 %s363, 7
        %s366 = smul.addr %s364, 4
        %s367 = scalar_lea.vmem %s188, %s366 [#allocation3]
        %v368 = vld [vmem:[%s367] sm:$0xf]
        %v369 = vld [vmem:[#allocation6] sm:$0xf]
        %v370 = vld [vmem:[#allocation6 + $0x4] sm:$0xf]
        %v371 = vld [vmem:[#allocation6 + $0x8] sm:$0xf]
        %v372 = vld [vmem:[#allocation6 + $0xc] sm:$0xf]
        %v373 = vld [vmem:[%s2] sm:$0x1]
        %v375 = vlaneseq
        %v376 = vshrl.u32 %v375, 7
        %v377 = vsub.s32 0, %v376
        %v378 = vrot.slane %v373, %v377
        %v384 = vunpack.c.l.b16 %v369
        %v385 = vunpack.c.l.b16 %v370
        %v386 = vunpack.c.l.b16 %v371
        %v387 = vunpack.c.l.b16 %v372
        %v388 = vpack.c.b16 %v385, %v384
        %v389 = vpack.c.b16 %v387, %v386
        %vm392 = vcmask 261120
        %v394 = vsel %vm392, %v368, 0
        %396 = vmatprep.subr.bf16.mxu0 0
        %397 = vmatpush1.bf16.msra.mxu0 %v388
        %398 = vmatprep.subr.bf16.mxu0 0
        %399 = vmatpush1.bf16.msra.mxu0 %v389
        %400 = vmatprep.subr.bf16.mxu0 0
        %401 = vmatpush1.bf16.msra.mxu0 0
        %402 = vmatprep.subr.bf16.mxu0 0
        %403 = vmatpush1.bf16.msra.mxu0 0
        %404 = vmatprep.subr.bf16.mxu0 0
        %405 = vmatpush1.bf16.msra.mxu0 0
        %406 = vmatprep.subr.bf16.mxu0 0
        %407 = vmatpush1.bf16.msra.mxu0 0
        %408 = vmatprep.subr.bf16.mxu0 0
        %409 = vmatpush1.bf16.msra.mxu0 0
        %410 = vmatprep.subr.bf16.mxu0 0
        %411 = vmatpush1.bf16.msra.mxu0 0
        %412 = vmatprep.subr.bf16.mxu0 0
        %413 = vmatpush1.bf16.msra.mxu0 0
        %414 = vmatprep.subr.bf16.mxu0 0
        %415 = vmatpush1.bf16.msra.mxu0 0
        %416 = vmatprep.subr.bf16.mxu0 0
        %417 = vmatpush1.bf16.msra.mxu0 0
        %418 = vmatprep.subr.bf16.mxu0 0
        %419 = vmatpush1.bf16.msra.mxu0 0
        %420 = vmatprep.subr.bf16.mxu0 0
        %421 = vmatpush1.bf16.msra.mxu0 0
        %422 = vmatprep.subr.bf16.mxu0 0
        %423 = vmatpush1.bf16.msra.mxu0 0
        %424 = vmatprep.subr.bf16.mxu0 0
        %425 = vmatpush1.bf16.msra.mxu0 0
        %426 = vmatprep.subr.bf16.mxu0 0
        %427 = vmatpush1.bf16.msra.mxu0 0
        %428 = vmatprep.mubr.bf16.mxu0 0
        %429 = vmatmul.mubr.bf16.gmra.mrb[0].mxu0 %v394
        %v430 = vpop.f32.mrb[0].mxu0
        %v431 = vadd.f32 %v378, %v430
        %v432 = vpop.f32.mrb[0].mxu0
        %v433 = vpop.f32.mrb[0].mxu0
        %v434 = vpop.f32.mrb[0].mxu0
        %435 = vdwg.mxu0
        %v436 = vmul.f32 %v431, 0.17677669
        %v437 = vld [vmem:[#allocation2] sm:$0xf]
        %s438 = scalar_lea.vmem [#allocation2], 4
        %v439 = vld [vmem:[%s438] sm:$0xf]
        %v440 = vpack.c.bf16 %v436, %v436
        %v442 = vsel %vm392, %v440, 0
        %v445 = vsel %vm392, %v437, 0
        %447 = vmatprep.subr.bf16.mxu0 0
        %448 = vmatpush1.bf16.xpose.msra.mxu0 %v445
        %449 = vmatprep.subr.bf16.mxu0 0
        %450 = vmatpush1.bf16.xpose.msra.mxu0 0
        %451 = vmatprep.subr.bf16.mxu0 0
        %452 = vmatpush1.bf16.xpose.msra.mxu0 0
        %453 = vmatprep.subr.bf16.mxu0 0
        %454 = vmatpush1.bf16.xpose.msra.mxu0 0
        %455 = vmatprep.subr.bf16.mxu0 0
        %456 = vmatpush1.bf16.xpose.msra.mxu0 0
        %457 = vmatprep.subr.bf16.mxu0 0
        %458 = vmatpush1.bf16.xpose.msra.mxu0 0
        %459 = vmatprep.subr.bf16.mxu0 0
        %460 = vmatpush1.bf16.xpose.msra.mxu0 0
        %461 = vmatprep.subr.bf16.mxu0 0
        %462 = vmatpush1.bf16.xpose.msra.mxu0 0
        %463 = vmatprep.subr.bf16.mxu0 0
        %464 = vmatpush1.bf16.xpose.msra.mxu0 0
        %465 = vmatprep.subr.bf16.mxu0 0
        %466 = vmatpush1.bf16.xpose.msra.mxu0 0
        %467 = vmatprep.subr.bf16.mxu0 0
        %468 = vmatpush1.bf16.xpose.msra.mxu0 0
        %469 = vmatprep.subr.bf16.mxu0 0
        %470 = vmatpush1.bf16.xpose.msra.mxu0 0
        %471 = vmatprep.subr.bf16.mxu0 0
        %472 = vmatpush1.bf16.xpose.msra.mxu0 0
        %473 = vmatprep.subr.bf16.mxu0 0
        %474 = vmatpush1.bf16.xpose.msra.mxu0 0
        %475 = vmatprep.subr.bf16.mxu0 0
        %476 = vmatpush1.bf16.xpose.msra.mxu0 0
        %477 = vmatprep.subr.bf16.mxu0 0
        %478 = vmatpush1.bf16.xpose.msra.mxu0 0
        %479 = vmatprep.mubr.bf16.mxu0 0
        %480 = vmatmul.mubr.bf16.gmra.mrb[0].mxu0 %v442
        %v481 = vpop.f32.mrb[0].mxu0
        %v482 = vadd.f32 0.0, %v481
        %v483 = vpop.f32.mrb[0].mxu0
        %v484 = vpop.f32.mrb[0].mxu0
        %v485 = vpop.f32.mrb[0].mxu0
        %486 = vdwg.mxu0
        %vm487 = vcmask 64512
        %v488 = vsel %vm487, %v482, -inf
        %489 = vmax.xlane.f32.xlu0 %v488
        %v490 = vpop.xlane.xlu0 %489
        %v491 = vsub.f32 %v482, %v490
        %v492 = vmul.f32 %v491, 1.442695
        %v493 = vpow.pop %v492
        %v494 = vsel %vm487, %v493, 0.0
        %495 = vadd.xlane.f32.xlu0 %v494
        %v496 = vpop.xlane.xlu0 %495
        %v497 = vpack.c.bf16 %v493, %v493
        %v499 = vsel %vm487, %v497, 0
        %vm501 = vcmask 1043456
        %v503 = vsel %vm501, %v439, 0
        %505 = vmatprep.subr.bf16.mxu0 0
        %506 = vmatpush1.bf16.msra.mxu0 %v503
        %507 = vmatprep.subr.bf16.mxu0 0
        %508 = vmatpush1.bf16.msra.mxu0 0
        %509 = vmatprep.subr.bf16.mxu0 0
        %510 = vmatpush1.bf16.msra.mxu0 0
        %511 = vmatprep.subr.bf16.mxu0 0
        %512 = vmatpush1.bf16.msra.mxu0 0
        %513 = vmatprep.subr.bf16.mxu0 0
        %514 = vmatpush1.bf16.msra.mxu0 0
        %515 = vmatprep.subr.bf16.mxu0 0
        %516 = vmatpush1.bf16.msra.mxu0 0
        %517 = vmatprep.subr.bf16.mxu0 0
        %518 = vmatpush1.bf16.msra.mxu0 0
        %519 = vmatprep.subr.bf16.mxu0 0
        %520 = vmatpush1.bf16.msra.mxu0 0
        %521 = vmatprep.subr.bf16.mxu0 0
        %522 = vmatpush1.bf16.msra.mxu0 0
        %523 = vmatprep.subr.bf16.mxu0 0
        %524 = vmatpush1.bf16.msra.mxu0 0
        %525 = vmatprep.subr.bf16.mxu0 0
        %526 = vmatpush1.bf16.msra.mxu0 0
        %527 = vmatprep.subr.bf16.mxu0 0
        %528 = vmatpush1.bf16.msra.mxu0 0
        %529 = vmatprep.subr.bf16.mxu0 0
        %530 = vmatpush1.bf16.msra.mxu0 0
        %531 = vmatprep.subr.bf16.mxu0 0
        %532 = vmatpush1.bf16.msra.mxu0 0
        %533 = vmatprep.subr.bf16.mxu0 0
        %534 = vmatpush1.bf16.msra.mxu0 0
        %535 = vmatprep.subr.bf16.mxu0 0
        %536 = vmatpush1.bf16.msra.mxu0 0
        %537 = vmatprep.mubr.bf16.mxu0 0
        %538 = vmatmul.mubr.bf16.gmra.mrb[0].mxu0 %v499
        %v539 = vpop.f32.mrb[0].mxu0
        %v540 = vadd.f32 0.0, %v539
        %v541 = vpop.f32.mrb[0].mxu0
        %v542 = vpop.f32.mrb[0].mxu0
        %v543 = vpop.f32.mrb[0].mxu0
        %544 = vdwg.mxu0
        %v545 = vrcp.pop %v496
        %v546 = vmul.f32 %v496, %v545
        %v547 = vsub.f32 2.0, %v546
        %v548 = vmul.f32 %v545, %v547
        %v549 = vmul.f32 %v540, %v548
        %550 = vst.msk [vmem:[%s214] sm:$0xff] %vm392, %v549
        %s551 = sand.u32 %s111, 1
        %s552 = scalar_lea.sflag [#allocation5], %s551
        %s553 = sand.u32 %s111, 1
        %s554 = smul.addr %s553, 8
        %s555 = scalar_lea.vmem [#allocation8], %s554
        // Predicated region
        $region45: #{tpu_custom_call.1} parent=31 // pred_check
          %p556 = pneg %p121
        $region46: #{tpu_custom_call.1} parent=31 // pred_check_branch
          %558 = sbr.rel (%p556) target = $region48
        $region47: #{tpu_custom_call.1} parent=31 // pred_region
          %s560 = ssub.s32 128, 128
          %561 = vsyncadd %s552, %s560
          %s562 = sadd.s32 %s26, %s25
          %s563 = smul.addr %s562, 128
          %s564 = scalar_lea.hbm %s3, %s563
          %s566 = sshll.u32 %s555, 4
          %s567 = int_to_ptr.vmem [resolvable:$true] %s566
          %569 = dma.vmem_to_hbm [thread:$0]  %s567, 128, %s564, %s552
        $region48: #{tpu_custom_call.1} parent=31 // pred_fallthru
          _
      $region32: #{tpu_custom_call.1} parent=5 // pred_fallthru
        _
      %p570 = scmp.le.s32.totalorder 2, %s16
      // Predicated region
      $region49: #{tpu_custom_call.1} parent=5 // pred_check
        %p571 = pneg %p570
      $region50: #{tpu_custom_call.1} parent=5 // pred_check_branch
        %573 = sbr.rel (%p571) target = $region52
      $region51: #{tpu_custom_call.1} parent=5 // pred_region
        %s574 = ssub.s32 %s16, 2
        // Predicated region
        $region53: #{tpu_custom_call.1} parent=51 // pred_check
          %p575 = pneg %p127
        $region54: #{tpu_custom_call.1} parent=51 // pred_check_branch
          %577 = sbr.rel (%p575) target = $region56
        $region55: #{tpu_custom_call.1} parent=51 // pred_region
          %s578 = sand.u32 %s112, 1
          %s579 = scalar_lea.sflag [#allocation5], %s578
          %s580 = sand.u32 %s112, 1
          %s581 = smul.addr %s580, 8
          %s582 = scalar_lea.vmem [#allocation8], %s581
          %583 = dma.done %s579, 128
        $region56: #{tpu_custom_call.1} parent=51 // pred_fallthru
          _
      $region52: #{tpu_custom_call.1} parent=5 // pred_fallthru
        _
    $region6: #{tpu_custom_call.1} parent=1 // loop_footer
      %s20 = sadd.s32 1, %s16
    $region7: #{tpu_custom_call.1} parent=1 // loop_footer_branch
      %15 = sbr.rel target = $region3
    $region8: #{tpu_custom_call.1} parent=1 // loop_exit
      _
    %584 = vsyncpa [#allocation4], 1
    %s585 = scalar_lea.sflag [#allocation4], 1
    %586 = vsyncpa %s585, 1
    %587 = vsyncpa [#allocation7], 1
    %588 = vsyncpa [#allocation5], 1
    %s589 = scalar_lea.sflag [#allocation5], 1
    %590 = vsyncpa %s589, 1

</llo_original>
